<compile_context>
chip_gen: v5e
topology: v5e:2x2
jax: 0.10.0
libtpu: 0.0.40
codegen_flags: <defaults>
</compile_context>

<pallas_src>
import functools

import jax
import jax.numpy as jnp
from jax.experimental import pallas as pl
from jax.experimental.pallas import tpu as pltpu

EPS = 1e-5      # PyTorch InstanceNorm3d default
_LANE = 128     # TPU lane width
_SUBLANE = 8    # TPU sublane width


def _round_up(v, m):
    return -(-v // m) * m


def _conv_stats_kernel(patches_ref, w_ref, y_ref, ssum_ref, ssq_ref):
    """Pass 1: conv-as-matmul for one P tile + per-channel sum / sumsq accum.

    patches_ref: (K, TP)       w_ref: (Coutp, K)
    y_ref:       (Coutp, TP)   ssum_ref / ssq_ref: (Coutp, 1), grid-resident
                               accumulators across the (last, arbitrary) P axis.
    """
    y = jnp.dot(w_ref[...], patches_ref[...],
                preferred_element_type=jnp.float32)          # (Coutp, TP) on MXU
    y_ref[...] = y.astype(y_ref.dtype)

    @pl.when(pl.program_id(1) == 0)
    def _init():
        ssum_ref[...] = jnp.zeros_like(ssum_ref)
        ssq_ref[...] = jnp.zeros_like(ssq_ref)

    # Zero-padded P columns contribute 0 to both sums -> stats stay exact.
    ssum_ref[...] += jnp.sum(y, axis=1, keepdims=True)
    ssq_ref[...] += jnp.sum(y * y, axis=1, keepdims=True)


def _norm_prelu_kernel(alpha_ref, mean_ref, rstd_ref, y_ref, o_ref):
    """Pass 2: InstanceNorm (affine=False) + PReLU on one (Coutp, TP) tile."""
    alpha = alpha_ref[0]
    y_n = (y_ref[...] - mean_ref[...]) * rstd_ref[...]
    o_ref[...] = jnp.where(y_n >= 0, y_n, alpha * y_n).astype(o_ref.dtype)


@functools.partial(jax.jit, static_argnames=("compute_dtype", "max_tile_p"))
def dadb_forward(x, conv_w, alpha, *, compute_dtype=jnp.float32, max_tile_p=None):
    """x: (N, Cin, D, H, W); conv_w: (Cout, Cin, 2, 2, 2); alpha: (1,)."""
    n, cin, d, h, w = x.shape
    cout = conv_w.shape[0]
    dp, hp, wp = d // 2, h // 2, w // 2
    p = dp * hp * wp
    k = cin * 8                            # always a multiple of 8 (sublane OK)

    coutp = _round_up(cout, _SUBLANE)      # sublane-pad channels
    p128 = _round_up(p, _LANE)

    # P-tile size from a VMEM budget safe on v5e/v6e/v7x scoped limits.
    elem = jnp.dtype(compute_dtype).itemsize
    bytes_per_col = 2 * k * elem + 4 * coutp * 4   # dbl-buffered patches + y/out
    budget = 12 * 1024 * 1024
    tp_cap = max(_LANE, min(4096, (budget // bytes_per_col) // _LANE * _LANE))
    if max_tile_p is not None:
        tp_cap = max(_LANE, min(tp_cap, max_tile_p // _LANE * _LANE))
    tp = min(tp_cap, p128)
    p_pad = _round_up(p, tp)
    n_pt = p_pad // tp

    # ---- pure-JAX glue: patchify to (N, K, P), weight to (Coutp, K) ----
    # K ordered (c, kd, kh, kw) to match conv_w.reshape; P ordered (dp, hp, wp)
    # so (N, Cout, P) reshapes directly to NCDHW at the end.
    # TODO(synk): fuse the 2x2x2 patch gather into the kernel (block over
    # (dp, hp) and deinterleave in VMEM) to avoid this HBM round-trip of x.
    xr = x.reshape(n, cin, dp, 2, hp, 2, wp, 2)
    patches = xr.transpose(0, 1, 3, 5, 7, 2, 4, 6).reshape(n, k, p)
    if p_pad != p:
        patches = jnp.pad(patches, ((0, 0), (0, 0), (0, p_pad - p)))
    patches = patches.astype(compute_dtype)

    w_mat = conv_w.reshape(cout, k)
    if coutp != cout:
        w_mat = jnp.pad(w_mat, ((0, coutp - cout), (0, 0)))
    w_mat = w_mat.astype(compute_dtype)

    # ---- pass 1: conv matmul per P tile + per-channel sum / sumsq ----
    y, ssum, ssq = pl.pallas_call(
        _conv_stats_kernel,
        out_shape=(
            jax.ShapeDtypeStruct((n, coutp, p_pad), jnp.float32),
            jax.ShapeDtypeStruct((n, coutp, 1), jnp.float32),
            jax.ShapeDtypeStruct((n, coutp, 1), jnp.float32),
        ),
        grid=(n, n_pt),
        in_specs=[
            pl.BlockSpec((pl.Squeezed(), k, tp), lambda b, pi: (b, 0, pi)),
            pl.BlockSpec((coutp, k), lambda b, pi: (0, 0)),      # resident weight
        ],
        out_specs=(
            pl.BlockSpec((pl.Squeezed(), coutp, tp), lambda b, pi: (b, 0, pi)),
            pl.BlockSpec((pl.Squeezed(), coutp, 1), lambda b, pi: (b, 0, 0)),
            pl.BlockSpec((pl.Squeezed(), coutp, 1), lambda b, pi: (b, 0, 0)),
        ),
        compiler_params=pltpu.CompilerParams(
            dimension_semantics=("parallel", "arbitrary"),
            vmem_limit_bytes=48 * 1024 * 1024),
    )(patches, w_mat)

    # ---- tiny per-(sample, channel) stats -> mean / rstd (plain JAX) ----
    inv_p = 1.0 / float(p)        # true P; zero-padded columns contributed 0
    mean = ssum * inv_p                                   # (N, Coutp, 1)
    var = jnp.maximum(ssq * inv_p - mean * mean, 0.0)     # guard f32 cancellation
    rstd = jax.lax.rsqrt(var + EPS)

    # ---- pass 2: InstanceNorm + PReLU, lane-dense (Coutp, TP) tiles ----
    out = pl.pallas_call(
        _norm_prelu_kernel,
        out_shape=jax.ShapeDtypeStruct((n, coutp, p_pad), x.dtype),
        grid=(n, n_pt),
        in_specs=[
            pl.BlockSpec(memory_space=pltpu.SMEM),                               # alpha
            pl.BlockSpec((pl.Squeezed(), coutp, 1), lambda b, pi: (b, 0, 0)),    # mean
            pl.BlockSpec((pl.Squeezed(), coutp, 1), lambda b, pi: (b, 0, 0)),    # rstd
            pl.BlockSpec((pl.Squeezed(), coutp, tp), lambda b, pi: (b, 0, pi)),  # y
        ],
        out_specs=pl.BlockSpec((pl.Squeezed(), coutp, tp), lambda b, pi: (b, 0, pi)),
        compiler_params=pltpu.CompilerParams(
            dimension_semantics=("parallel", "parallel"),
            vmem_limit_bytes=48 * 1024 * 1024),
    )(alpha, mean, rstd, y)

    # (N, Coutp, P_pad) -> drop channel/spatial padding -> NCDHW, no transpose.
    return out[:, :cout, :p].reshape(n, cout, dp, hp, wp)


def _reference(x, conv_w, alpha):
    """Pure-JAX reference: Conv3d(k=2,s=2,bias=False) -> InstanceNorm3d -> PReLU."""
    y = jax.lax.conv_general_dilated(
        x, conv_w, window_strides=(2, 2, 2), padding="VALID",
        dimension_numbers=("NCDHW", "OIDHW", "NCDHW"),
        precision=jax.lax.Precision.HIGHEST)
    mean = jnp.mean(y, axis=(2, 3, 4), keepdims=True)
    var = jnp.var(y, axis=(2, 3, 4), keepdims=True)
    y_n = (y - mean) * jax.lax.rsqrt(var + EPS)
    return jnp.where(y_n >= 0, y_n, alpha[0] * y_n)


def _make_inputs(key, n, cin, cout, dhw):
    kx, kw = jax.random.split(key)
    x = jax.random.normal(kx, (n, cin, dhw, dhw, dhw), dtype=jnp.float32)
    fan_in = cin * 8
    bound = 1.0 / (fan_in ** 0.5)
    conv_w = jax.random.uniform(kw, (cout, cin, 2, 2, 2), dtype=jnp.float32,
                                minval=-bound, maxval=bound)
    alpha = jnp.array([0.25], dtype=jnp.float32)       # PReLU default init
    return x, conv_w, alpha


if __name__ == "__main__":
    key = jax.random.PRNGKey(0)
    k1, k2 = jax.random.split(key)

    # Test A: small module-consistent shapes, f32 path.
    x, cw, al = _make_inputs(k1, n=2, cin=4, cout=8, dhw=8)
    out = dadb_forward(x, cw, al)
    jax.block_until_ready(out)
    ref = _reference(x, cw, al)
    assert out.shape == (2, 8, 4, 4, 4)
    assert jnp.allclose(out, ref, atol=2e-4, rtol=2e-4), "f32 mismatch (A)"

    # Test B: Cout not a multiple of 8, P not a multiple of 128, forced 128-wide
    # P tiles -> exercises channel padding, ragged last tile and multi-tile
    # stats accumulation.
    xb, cwb, alb = _make_inputs(k2, n=1, cin=4, cout=6, dhw=12)
    outb = dadb_forward(xb, cwb, alb, max_tile_p=128)
    jax.block_until_ready(outb)
    refb = _reference(xb, cwb, alb)
    assert outb.shape == (1, 6, 6, 6, 6)
    assert jnp.allclose(outb, refb, atol=2e-4, rtol=2e-4), "f32 mismatch (B)"

    # Test C: bf16 matmul inputs (f32 accumulate + f32 norm), relaxed tolerance.
    outc = dadb_forward(x, cw, al, compute_dtype=jnp.bfloat16)
    jax.block_until_ready(outc)
    assert jnp.allclose(outc, ref, atol=1e-1, rtol=1e-1), "bf16 mismatch (C)"

    print("KERNEL_OK")
</pallas_src>

<mosaic_0001>
module attributes {stable_mosaic.version = 11 : i64} {
  func.func @_conv_stats_kernel(%arg0: i32, %arg1: i32, %arg2: memref<1x32x128xf32, #tpu.memory_space<vmem>>, %arg3: memref<8x32xf32, #tpu.memory_space<vmem>>, %arg4: memref<1x8x128xf32, #tpu.memory_space<vmem>>, %arg5: memref<1x8x1xf32, #tpu.memory_space<vmem>>, %arg6: memref<1x8x1xf32, #tpu.memory_space<vmem>>) attributes {dimension_semantics = [#tpu.dimension_semantics<parallel>, #tpu.dimension_semantics<arbitrary>], iteration_bounds = array<i64: 2, 1>, scalar_prefetch = 0 : i64, scratch_operands = 0 : i64, tpu.core_type = #tpu.core_type<tc>, window_params = [{transform_indices = @transform_0, window_bounds = array<i64: 1, 32, 128>}, {pipeline_mode = #tpu.pipeline_mode<synchronous>, transform_indices = @transform_1, window_bounds = array<i64: 8, 32>}, {transform_indices = @transform_2, window_bounds = array<i64: 1, 8, 128>}, {transform_indices = @transform_3, window_bounds = array<i64: 1, 8, 1>}, {transform_indices = @transform_4, window_bounds = array<i64: 1, 8, 1>}]} {
    %c0 = arith.constant 0 : index
    %c0_0 = arith.constant 0 : index
    %0 = vector.load %arg3[%c0, %c0_0] : memref<8x32xf32, #tpu.memory_space<vmem>>, vector<8x32xf32>
    %c0_1 = arith.constant 0 : index
    %c0_2 = arith.constant 0 : index
    %c0_3 = arith.constant 0 : index
    %1 = vector.load %arg2[%c0_1, %c0_2, %c0_3] : memref<1x32x128xf32, #tpu.memory_space<vmem>>, vector<1x32x128xf32>
    %2 = vector.shape_cast %1 : vector<1x32x128xf32> to vector<32x128xf32>
    %cst = arith.constant dense<0.000000e+00> : vector<8x128xf32>
    %3 = tpu.matmul %0, %2, %cst {dimension_numbers = #tpu.dot_dimension_numbers<[1], [0], [0], [1], [0, 0, 1, 1], [], []>} : vector<8x32xf32>, vector<32x128xf32>, vector<8x128xf32> -> vector<8x128xf32>
    %c0_4 = arith.constant 0 : index
    %c0_5 = arith.constant 0 : index
    %c0_6 = arith.constant 0 : index
    %4 = vector.load %arg4[%c0_4, %c0_5, %c0_6] : memref<1x8x128xf32, #tpu.memory_space<vmem>>, vector<1x8x128xf32>
    %5 = vector.shape_cast %4 : vector<1x8x128xf32> to vector<8x128xf32>
    %6 = vector.shape_cast %3 : vector<8x128xf32> to vector<1x8x128xf32>
    tpu.vector_store %arg4[%c0_4, %c0_5, %c0_6], %6 {strides = array<i32>} : memref<1x8x128xf32, #tpu.memory_space<vmem>>, vector<1x8x128xf32>,
    %c0_i32 = arith.constant 0 : i32
    %7 = arith.cmpi eq, %arg1, %c0_i32 : i32
    %8 = arith.extui %7 : i1 to i32
    %c0_i32_7 = arith.constant 0 : i32
    %9 = arith.cmpi ne, %8, %c0_i32_7 : i32
    scf.if %9 {
      %cst_22 = arith.constant 0.000000e+00 : f32
      %27 = vector.broadcast %cst_22 : f32 to vector<8x1xf32>
      %c0_23 = arith.constant 0 : index
      %c0_24 = arith.constant 0 : index
      %c0_25 = arith.constant 0 : index
      %28 = vector.load %arg5[%c0_23, %c0_24, %c0_25] : memref<1x8x1xf32, #tpu.memory_space<vmem>>, vector<1x8x1xf32>
      %29 = vector.shape_cast %28 : vector<1x8x1xf32> to vector<8x1xf32>
      %30 = vector.shape_cast %27 : vector<8x1xf32> to vector<1x8x1xf32>
      tpu.vector_store %arg5[%c0_23, %c0_24, %c0_25], %30 {strides = array<i32>} : memref<1x8x1xf32, #tpu.memory_space<vmem>>, vector<1x8x1xf32>,
      %cst_26 = arith.constant 0.000000e+00 : f32
      %31 = vector.broadcast %cst_26 : f32 to vector<8x1xf32>
      %c0_27 = arith.constant 0 : index
      %c0_28 = arith.constant 0 : index
      %c0_29 = arith.constant 0 : index
      %32 = vector.load %arg6[%c0_27, %c0_28, %c0_29] : memref<1x8x1xf32, #tpu.memory_space<vmem>>, vector<1x8x1xf32>
      %33 = vector.shape_cast %32 : vector<1x8x1xf32> to vector<8x1xf32>
      %34 = vector.shape_cast %31 : vector<8x1xf32> to vector<1x8x1xf32>
      tpu.vector_store %arg6[%c0_27, %c0_28, %c0_29], %34 {strides = array<i32>} : memref<1x8x1xf32, #tpu.memory_space<vmem>>, vector<1x8x1xf32>,
    } else {
    }
    %c0_8 = arith.constant 0 : index
    %c0_9 = arith.constant 0 : index
    %c0_10 = arith.constant 0 : index
    %10 = vector.load %arg5[%c0_8, %c0_9, %c0_10] : memref<1x8x1xf32, #tpu.memory_space<vmem>>, vector<1x8x1xf32>
    %11 = vector.shape_cast %10 : vector<1x8x1xf32> to vector<8x1xf32>
    %cst_11 = arith.constant dense<0.000000e+00> : vector<8xf32>
    %12 = vector.multi_reduction <add>, %3, %cst_11 [1] : vector<8x128xf32> to vector<8xf32>
    %13 = vector.shape_cast %12 : vector<8xf32> to vector<8x1xf32>
    %14 = arith.addf %11, %13 : vector<8x1xf32>
    %c0_12 = arith.constant 0 : index
    %c0_13 = arith.constant 0 : index
    %c0_14 = arith.constant 0 : index
    %15 = vector.load %arg5[%c0_12, %c0_13, %c0_14] : memref<1x8x1xf32, #tpu.memory_space<vmem>>, vector<1x8x1xf32>
    %16 = vector.shape_cast %15 : vector<1x8x1xf32> to vector<8x1xf32>
    %17 = vector.shape_cast %14 : vector<8x1xf32> to vector<1x8x1xf32>
    tpu.vector_store %arg5[%c0_12, %c0_13, %c0_14], %17 {strides = array<i32>} : memref<1x8x1xf32, #tpu.memory_space<vmem>>, vector<1x8x1xf32>,
    %c0_15 = arith.constant 0 : index
    %c0_16 = arith.constant 0 : index
    %c0_17 = arith.constant 0 : index
    %18 = vector.load %arg6[%c0_15, %c0_16, %c0_17] : memref<1x8x1xf32, #tpu.memory_space<vmem>>, vector<1x8x1xf32>
    %19 = vector.shape_cast %18 : vector<1x8x1xf32> to vector<8x1xf32>
    %20 = arith.mulf %3, %3 : vector<8x128xf32>
    %cst_18 = arith.constant dense<0.000000e+00> : vector<8xf32>
    %21 = vector.multi_reduction <add>, %20, %cst_18 [1] : vector<8x128xf32> to vector<8xf32>
    %22 = vector.shape_cast %21 : vector<8xf32> to vector<8x1xf32>
    %23 = arith.addf %19, %22 : vector<8x1xf32>
    %c0_19 = arith.constant 0 : index
    %c0_20 = arith.constant 0 : index
    %c0_21 = arith.constant 0 : index
    %24 = vector.load %arg6[%c0_19, %c0_20, %c0_21] : memref<1x8x1xf32, #tpu.memory_space<vmem>>, vector<1x8x1xf32>
    %25 = vector.shape_cast %24 : vector<1x8x1xf32> to vector<8x1xf32>
    %26 = vector.shape_cast %23 : vector<8x1xf32> to vector<1x8x1xf32>
    tpu.vector_store %arg6[%c0_19, %c0_20, %c0_21], %26 {strides = array<i32>} : memref<1x8x1xf32, #tpu.memory_space<vmem>>, vector<1x8x1xf32>,
    return
  }
  func.func @transform_0(%arg0: i32, %arg1: i32) -> (i32, i32, i32) {
    %c0_i32 = arith.constant 0 : i32
    %c0_i32_0 = arith.constant 0 : i32
    return %arg0, %c0_i32, %arg1 : i32, i32, i32
  }
  func.func @transform_1(%arg0: i32, %arg1: i32) -> (i32, i32) {
    %c0_i32 = arith.constant 0 : i32
    %c0_i32_0 = arith.constant 0 : i32
    %c0_i32_1 = arith.constant 0 : i32
    return %c0_i32, %c0_i32_0 : i32, i32
  }
  func.func @transform_2(%arg0: i32, %arg1: i32) -> (i32, i32, i32) {
    %c0_i32 = arith.constant 0 : i32
    %c0_i32_0 = arith.constant 0 : i32
    return %arg0, %c0_i32, %arg1 : i32, i32, i32
  }
  func.func @transform_3(%arg0: i32, %arg1: i32) -> (i32, i32, i32) {
    %c0_i32 = arith.constant 0 : i32
    %c0_i32_0 = arith.constant 0 : i32
    %c0_i32_1 = arith.constant 0 : i32
    return %arg0, %c0_i32, %c0_i32_0 : i32, i32, i32
  }
  func.func @transform_4(%arg0: i32, %arg1: i32) -> (i32, i32, i32) {
    %c0_i32 = arith.constant 0 : i32
    %c0_i32_0 = arith.constant 0 : i32
    %c0_i32_1 = arith.constant 0 : i32
    return %arg0, %c0_i32, %c0_i32_0 : i32, i32, i32
  }
}

module attributes {stable_mosaic.version = 11 : i64} {
  func.func @_norm_prelu_kernel(%arg0: i32, %arg1: i32, %arg2: memref<1xf32, #tpu.memory_space<smem>>, %arg3: memref<1x8x1xf32, #tpu.memory_space<vmem>>, %arg4: memref<1x8x1xf32, #tpu.memory_space<vmem>>, %arg5: memref<1x8x128xf32, #tpu.memory_space<vmem>>, %arg6: memref<1x8x128xf32, #tpu.memory_space<vmem>>) attributes {dimension_semantics = [#tpu.dimension_semantics<parallel>, #tpu.dimension_semantics<parallel>], iteration_bounds = array<i64: 2, 1>, scalar_prefetch = 0 : i64, scratch_operands = 0 : i64, tpu.core_type = #tpu.core_type<tc>, window_params = [{transform_indices = @transform_0, window_bounds = array<i64: 1>}, {transform_indices = @transform_1, window_bounds = array<i64: 1, 8, 1>}, {transform_indices = @transform_2, window_bounds = array<i64: 1, 8, 1>}, {transform_indices = @transform_3, window_bounds = array<i64: 1, 8, 128>}, {transform_indices = @transform_4, window_bounds = array<i64: 1, 8, 128>}]} {
    %c0 = arith.constant 0 : index
    %0 = memref.load %arg2[%c0] : memref<1xf32, #tpu.memory_space<smem>>
    %c0_0 = arith.constant 0 : index
    %c0_1 = arith.constant 0 : index
    %c0_2 = arith.constant 0 : index
    %1 = vector.load %arg5[%c0_0, %c0_1, %c0_2] : memref<1x8x128xf32, #tpu.memory_space<vmem>>, vector<1x8x128xf32>
    %2 = vector.shape_cast %1 : vector<1x8x128xf32> to vector<8x128xf32>
    %c0_3 = arith.constant 0 : index
    %c0_4 = arith.constant 0 : index
    %c0_5 = arith.constant 0 : index
    %3 = vector.load %arg3[%c0_3, %c0_4, %c0_5] : memref<1x8x1xf32, #tpu.memory_space<vmem>>, vector<1x8x1xf32>
    %4 = vector.shape_cast %3 : vector<1x8x1xf32> to vector<8x1xf32>
    %5 = vector.broadcast %4 : vector<8x1xf32> to vector<8x128xf32>
    %6 = arith.subf %2, %5 : vector<8x128xf32>
    %c0_6 = arith.constant 0 : index
    %c0_7 = arith.constant 0 : index
    %c0_8 = arith.constant 0 : index
    %7 = vector.load %arg4[%c0_6, %c0_7, %c0_8] : memref<1x8x1xf32, #tpu.memory_space<vmem>>, vector<1x8x1xf32>
    %8 = vector.shape_cast %7 : vector<1x8x1xf32> to vector<8x1xf32>
    %9 = vector.broadcast %8 : vector<8x1xf32> to vector<8x128xf32>
    %10 = arith.mulf %6, %9 : vector<8x128xf32>
    %cst = arith.constant 0.000000e+00 : f32
    %11 = vector.broadcast %cst : f32 to vector<8x128xf32>
    %12 = arith.cmpf oge, %10, %11 : vector<8x128xf32>
    %13 = vector.broadcast %0 : f32 to vector<8x128xf32>
    %14 = arith.mulf %13, %10 : vector<8x128xf32>
    %15 = arith.select %12, %10, %14 : vector<8x128xi1>, vector<8x128xf32>
    %c0_9 = arith.constant 0 : index
    %c0_10 = arith.constant 0 : index
    %c0_11 = arith.constant 0 : index
    %16 = vector.load %arg6[%c0_9, %c0_10, %c0_11] : memref<1x8x128xf32, #tpu.memory_space<vmem>>, vector<1x8x128xf32>
    %17 = vector.shape_cast %16 : vector<1x8x128xf32> to vector<8x128xf32>
    %18 = vector.shape_cast %15 : vector<8x128xf32> to vector<1x8x128xf32>
    tpu.vector_store %arg6[%c0_9, %c0_10, %c0_11], %18 {strides = array<i32>} : memref<1x8x128xf32, #tpu.memory_space<vmem>>, vector<1x8x128xf32>,
    return
  }
  func.func @transform_0(%arg0: i32, %arg1: i32) -> i32 {
    %c0_i32 = arith.constant 0 : i32
    %c0_i32_0 = arith.constant 0 : i32
    return %c0_i32 : i32
  }
  func.func @transform_1(%arg0: i32, %arg1: i32) -> (i32, i32, i32) {
    %c0_i32 = arith.constant 0 : i32
    %c0_i32_0 = arith.constant 0 : i32
    %c0_i32_1 = arith.constant 0 : i32
    return %arg0, %c0_i32, %c0_i32_0 : i32, i32, i32
  }
  func.func @transform_2(%arg0: i32, %arg1: i32) -> (i32, i32, i32) {
    %c0_i32 = arith.constant 0 : i32
    %c0_i32_0 = arith.constant 0 : i32
    %c0_i32_1 = arith.constant 0 : i32
    return %arg0, %c0_i32, %c0_i32_0 : i32, i32, i32
  }
  func.func @transform_3(%arg0: i32, %arg1: i32) -> (i32, i32, i32) {
    %c0_i32 = arith.constant 0 : i32
    %c0_i32_0 = arith.constant 0 : i32
    return %arg0, %c0_i32, %arg1 : i32, i32, i32
  }
  func.func @transform_4(%arg0: i32, %arg1: i32) -> (i32, i32, i32) {
    %c0_i32 = arith.constant 0 : i32
    %c0_i32_0 = arith.constant 0 : i32
    return %arg0, %c0_i32, %arg1 : i32, i32, i32
  }
}

</mosaic_0001>

<llo_original>
// kernel: dadb_forward.2
$region0: #{dadb_forward.2}
  #allocation0 [shape = 'u32[]', space=smem, size = 0x4, offset = 0x4, fixed_abs, tag = 'smem constant byte address 0x4 - core index']
  #allocation1 [shape = 'u32[72,128]{1,0:T(1,128)}', space=vmem, size = 0x9000, scoped, tag = 'internal scratch']
  %s0 = inlined_call_operand.vmem [shape: f32[2,32,128], index: 0, kind: input, shape index: {}]
  %s1 = inlined_call_operand.vmem [shape: f32[8,32], index: 1, kind: input, shape index: {}]
  %s2 = inlined_call_operand.vmem [shape: f32[2,8,128], index: 2, kind: output, shape index: {0}]
  %s3 = inlined_call_operand.vmem [shape: f32[2,8,1], index: 3, kind: output, shape index: {1}]
  %s4 = inlined_call_operand.vmem [shape: f32[2,8,1], index: 4, kind: output, shape index: {2}]
  %5 = xla_tuple %s2, %s3, %s4
  %s6 = sld [smem:[#allocation0]]
  $region61: #{dadb_forward.2} parent=0
    _
  %s8 = ssub.s32 1, %s6
  %s9 = scalar_select 0, %s8, %s6
  loop: start=0, step=1, limit=4
  $region2: #{dadb_forward.2} parent=0 // loop_pre_header
    _
  $region3: #{dadb_forward.2} parent=0 // loop_header
    %s11 = sphi 0, %s15
    %p12 = scmp.ge.s32.totalorder %s11, 4
    %s18 = sphi 0, %s30
    %s19 = sphi 0, %s26
    %s20 = sphi 0, %s18
    %s21 = sphi 0, %s19
    %s22 = sphi 0, %s20
    %s23 = sphi 0, %s21
    %s35 = sphi 0, %s37
    %s38 = sphi 0, %s35
    %s39 = sphi 0, %s38
    %s55 = sphi 0, %s39
    %s59 = sphi 0, %s59
    %s61 = sphi 0, %s59
    %s62 = sphi 0, %s61
    %s76 = sphi 0, %s62
    %s84 = sphi 0, %s86
    %s87 = sphi 0, %s84
    %s88 = sphi 0, %s87
    %s104 = sphi 0, %s88
    %s110 = sphi 0, %s112
    %s113 = sphi 0, %s110
    %s114 = sphi 0, %s113
    %s130 = sphi 0, %s114
    %s136 = sphi 0, %s138
    %s139 = sphi 0, %s136
    %s140 = sphi 0, %s139
    %s156 = sphi 0, %s140
  $region4: #{dadb_forward.2} parent=0 // loop_header_branch
    %14 = sbr.rel (%p12) target = $region8
  $region5: #{dadb_forward.2} parent=0 // loop_body
    %s16 = ssub.s32 %s11, 1
    %s17 = ssub.s32 %s11, 2
    %s24 = sadd.s32 1, %s19
    %p25 = scmp.ge.s32.totalorder %s24, 1
    %s26 = scalar_select %p25, 0, %s24
    %s27 = sadd.s32 1, %s18
    %s28 = scalar_select %p25, %s27, %s18
    %p29 = scmp.ge.s32.totalorder %s28, 2
    %s30 = scalar_select %p29, 0, %s28
    %s31 = ssub.s32 %s18, %s30
    %s32 = ssub.s32 %s19, %s26
    %s33 = sor.u32 %s31, %s32
    %p34 = scmp.eq.s32.totalorder %s33, 0
    %s36 = sadd.s32 %s35, 1
    %s37 = scalar_select %p34, %s35, %s36
    %p40 = pneg %p34
    %p41 = scmp.eq.s32.totalorder %s11, 1
    %p42 = por %p40, %p41
    %p43 = scmp.ne.s32.totalorder %s35, %s38
    %p44 = scmp.eq.s32.totalorder %s11, 0
    %p45 = por %p43, %p44
    %p46 = scmp.ne.s32.totalorder %s35, %s38
    %p47 = scmp.eq.s32.totalorder %s16, 1
    %p48 = por %p46, %p47
    %p49 = scmp.ne.s32.totalorder %s38, %s39
    %p50 = scmp.eq.s32.totalorder %s16, 0
    %p51 = por %p49, %p50
    %p52 = scmp.ne.s32.totalorder %s38, %s39
    %p53 = scmp.eq.s32.totalorder %s17, 1
    %p54 = por %p52, %p53
    %p56 = scmp.ne.s32.totalorder %s39, %s55
    %p57 = scmp.eq.s32.totalorder %s17, 0
    %p58 = por %p56, %p57
    %s60 = sadd.s32 %s59, 1
    %p63 = scmp.eq.s32.totalorder %s11, 1
    %p64 = scmp.ne.s32.totalorder %s59, %s61
    %p65 = scmp.eq.s32.totalorder %s11, 0
    %p66 = por %p64, %p65
    %p67 = scmp.ne.s32.totalorder %s59, %s61
    %p68 = scmp.eq.s32.totalorder %s16, 1
    %p69 = por %p67, %p68
    %p70 = scmp.ne.s32.totalorder %s61, %s62
    %p71 = scmp.eq.s32.totalorder %s16, 0
    %p72 = por %p70, %p71
    %p73 = scmp.ne.s32.totalorder %s61, %s62
    %p74 = scmp.eq.s32.totalorder %s17, 1
    %p75 = por %p73, %p74
    %p77 = scmp.ne.s32.totalorder %s62, %s76
    %p78 = scmp.eq.s32.totalorder %s17, 0
    %p79 = por %p77, %p78
    %s80 = ssub.s32 %s18, %s30
    %s81 = ssub.s32 %s19, %s26
    %s82 = sor.u32 %s80, %s81
    %p83 = scmp.eq.s32.totalorder %s82, 0
    %s85 = sadd.s32 %s84, 1
    %s86 = scalar_select %p83, %s84, %s85
    %p89 = pneg %p83
    %p90 = scmp.eq.s32.totalorder %s11, 1
    %p91 = por %p89, %p90
    %p92 = scmp.ne.s32.totalorder %s84, %s87
    %p93 = scmp.eq.s32.totalorder %s11, 0
    %p94 = por %p92, %p93
    %p95 = scmp.ne.s32.totalorder %s84, %s87
    %p96 = scmp.eq.s32.totalorder %s16, 1
    %p97 = por %p95, %p96
    %p98 = scmp.ne.s32.totalorder %s87, %s88
    %p99 = scmp.eq.s32.totalorder %s16, 0
    %p100 = por %p98, %p99
    %p101 = scmp.ne.s32.totalorder %s87, %s88
    %p102 = scmp.eq.s32.totalorder %s17, 1
    %p103 = por %p101, %p102
    %p105 = scmp.ne.s32.totalorder %s88, %s104
    %p106 = scmp.eq.s32.totalorder %s17, 0
    %p107 = por %p105, %p106
    %s108 = ssub.s32 %s18, %s30
    %p109 = scmp.eq.s32.totalorder %s108, 0
    %s111 = sadd.s32 %s110, 1
    %s112 = scalar_select %p109, %s110, %s111
    %p115 = pneg %p109
    %p116 = scmp.eq.s32.totalorder %s11, 1
    %p117 = por %p115, %p116
    %p118 = scmp.ne.s32.totalorder %s110, %s113
    %p119 = scmp.eq.s32.totalorder %s11, 0
    %p120 = por %p118, %p119
    %p121 = scmp.ne.s32.totalorder %s110, %s113
    %p122 = scmp.eq.s32.totalorder %s16, 1
    %p123 = por %p121, %p122
    %p124 = scmp.ne.s32.totalorder %s113, %s114
    %p125 = scmp.eq.s32.totalorder %s16, 0
    %p126 = por %p124, %p125
    %p127 = scmp.ne.s32.totalorder %s113, %s114
    %p128 = scmp.eq.s32.totalorder %s17, 1
    %p129 = por %p127, %p128
    %p131 = scmp.ne.s32.totalorder %s114, %s130
    %p132 = scmp.eq.s32.totalorder %s17, 0
    %p133 = por %p131, %p132
    %s134 = ssub.s32 %s18, %s30
    %p135 = scmp.eq.s32.totalorder %s134, 0
    %s137 = sadd.s32 %s136, 1
    %s138 = scalar_select %p135, %s136, %s137
    %p141 = pneg %p135
    %p142 = scmp.eq.s32.totalorder %s11, 1
    %p143 = por %p141, %p142
    %p144 = scmp.ne.s32.totalorder %s136, %s139
    %p145 = scmp.eq.s32.totalorder %s11, 0
    %p146 = por %p144, %p145
    %p147 = scmp.ne.s32.totalorder %s136, %s139
    %p148 = scmp.eq.s32.totalorder %s16, 1
    %p149 = por %p147, %p148
    %p150 = scmp.ne.s32.totalorder %s139, %s140
    %p151 = scmp.eq.s32.totalorder %s16, 0
    %p152 = por %p150, %p151
    %p153 = scmp.ne.s32.totalorder %s139, %s140
    %p154 = scmp.eq.s32.totalorder %s17, 1
    %p155 = por %p153, %p154
    %p157 = scmp.ne.s32.totalorder %s140, %s156
    %p158 = scmp.eq.s32.totalorder %s17, 0
    %p159 = por %p157, %p158
    %p160 = scmp.le.s32.totalorder 1, %s11
    %p161 = scmp.lt.s32.totalorder %s11, 3
    %p162 = pnand %p160, %p161
    %p163 = pneg %p162
    // Predicated region
    $region9: #{dadb_forward.2} parent=5 // pred_check
      _
    $region10: #{dadb_forward.2} parent=5 // pred_check_branch
      %165 = sbr.rel (%p162) target = $region12
    $region11: #{dadb_forward.2} parent=5 // pred_region
      %s166 = ssub.s32 %s11, 1
      // Predicated region
      $region13: #{dadb_forward.2} parent=11 // pred_check
        %p167 = pneg %p72
      $region14: #{dadb_forward.2} parent=11 // pred_check_branch
        %169 = sbr.rel (%p167) target = $region16
      $region15: #{dadb_forward.2} parent=11 // pred_region
        _
      $region16: #{dadb_forward.2} parent=11 // pred_fallthru
        _
    $region12: #{dadb_forward.2} parent=5 // pred_fallthru
      _
    %p170 = scmp.lt.s32.totalorder %s11, 2
    // Predicated region
    $region17: #{dadb_forward.2} parent=5 // pred_check
      %p171 = pneg %p170
    $region18: #{dadb_forward.2} parent=5 // pred_check_branch
      %173 = sbr.rel (%p171) target = $region20
    $region19: #{dadb_forward.2} parent=5 // pred_region
      // Predicated region
      $region21: #{dadb_forward.2} parent=19 // pred_check
        %p174 = pneg %p45
      $region22: #{dadb_forward.2} parent=19 // pred_check_branch
        %176 = sbr.rel (%p174) target = $region24
      $region23: #{dadb_forward.2} parent=19 // pred_region
        %p177 = scmp.lt.s32.totalorder %s18, 1
        %s178 = scalar_select %p177, %s18, 1
        %p179 = scmp.lt.s32.totalorder %s19, 0
        %s180 = scalar_select %p179, %s19, 0
        %s181 = smul.addr %s178, 4
        %s182 = sadd.s32 %s180, %s181
        %s183 = smul.addr %s182, 8
        %s184 = scalar_lea.vmem %s0, %s183
      $region24: #{dadb_forward.2} parent=19 // pred_fallthru
        _
    $region20: #{dadb_forward.2} parent=5 // pred_fallthru
      _
    %p185 = scmp.le.s32.totalorder 1, %s11
    %p186 = scmp.lt.s32.totalorder %s11, 3
    %p187 = pnand %p185, %p186
    %p188 = pneg %p187
    // Predicated region
    $region25: #{dadb_forward.2} parent=5 // pred_check
      _
    $region26: #{dadb_forward.2} parent=5 // pred_check_branch
      %190 = sbr.rel (%p187) target = $region28
    $region27: #{dadb_forward.2} parent=5 // pred_region
      %s191 = ssub.s32 %s11, 1
      %p192 = scmp.lt.s32.totalorder %s20, 1
      %s193 = scalar_select %p192, %s20, 1
      %p194 = scmp.lt.s32.totalorder %s21, 0
      %s195 = scalar_select %p194, %s21, 0
      %s196 = smul.addr %s193, 4
      %s197 = sadd.s32 %s195, %s196
      %s198 = smul.addr %s197, 8
      %s199 = scalar_lea.vmem %s0, %s198
      %p200 = pneg %p51
      %p201 = pneg %p48
      %p202 = pneg %p72
      %p203 = pneg %p69
      %p204 = pneg %p100
      %p205 = pneg %p97
      %p206 = scmp.lt.s32.totalorder %s20, 1
      %s207 = scalar_select %p206, %s20, 1
      %p208 = scmp.lt.s32.totalorder %s21, 0
      %s209 = scalar_select %p208, %s21, 0
      %s210 = sadd.s32 %s209, %s207
      %s211 = smul.addr %s210, 8
      %s212 = scalar_lea.vmem %s2, %s211
      %p213 = pneg %p126
      %p214 = pneg %p123
      %p215 = scmp.lt.s32.totalorder %s20, 1
      %s216 = scalar_select %p215, %s20, 1
      %s217 = smul.addr %s216, 8
      %s218 = scalar_lea.vmem %s3, %s217
      %p219 = pneg %p152
      %p220 = pneg %p149
      %p221 = scmp.lt.s32.totalorder %s20, 1
      %s222 = scalar_select %p221, %s20, 1
      %s223 = smul.addr %s222, 8
      %s224 = scalar_lea.vmem %s4, %s223
      %p225 = scmp.lt.s32.totalorder %s20, 1
      %s226 = scalar_select %p225, %s20, 1
      %p227 = scmp.lt.s32.totalorder %s21, 0
      %s228 = scalar_select %p227, %s21, 0
      %s229 = smul.addr %s226, 4
      %s230 = sadd.s32 %s228, %s229
      %s231 = smul.addr %s230, 8
      %s232 = scalar_lea.vmem %s0, %s231
      %p233 = scmp.lt.s32.totalorder %s20, 1
      %s234 = scalar_select %p233, %s20, 1
      %p235 = scmp.lt.s32.totalorder %s21, 0
      %s236 = scalar_select %p235, %s21, 0
      %s237 = sadd.s32 %s236, %s234
      %s238 = smul.addr %s237, 8
      %s239 = scalar_lea.vmem %s2, %s238
      %p240 = scmp.lt.s32.totalorder %s20, 1
      %s241 = scalar_select %p240, %s20, 1
      %s242 = smul.addr %s241, 8
      %s243 = scalar_lea.vmem %s3, %s242
      %p244 = scmp.lt.s32.totalorder %s20, 1
      %s245 = scalar_select %p244, %s20, 1
      %s246 = smul.addr %s245, 8
      %s247 = scalar_lea.vmem %s4, %s246
      %v248 = vld [vmem:[%s1] sm:$0xff]
      %v249 = vld [vmem:[%s232] sm:$0xff]
      %v250 = vld [vmem:[%s232 + $0x8] sm:$0xff]
      %v251 = vld [vmem:[%s232 + $0x10] sm:$0xff]
      %v252 = vld [vmem:[%s232 + $0x18] sm:$0xff]
      %vm253 = vcmask 261120
      %v255 = vsel %vm253, %v248, 0
      %257 = vmatpush.msra.mxu0 0.0
      %258 = vmatpush.msra.mxu0 0.0
      %259 = vmatpush.msra.mxu0 0.0
      %260 = vmatpush.msra.mxu0 0.0
      %261 = vmatpush.msra.mxu0 0.0
      %262 = vmatpush.msra.mxu0 0.0
      %263 = vmatpush.msra.mxu0 0.0
      %264 = vmatpush.msra.mxu0 0.0
      %265 = vmatpush.msra.mxu0 0.0
      %266 = vmatpush.msra.mxu0 0.0
      %267 = vmatpush.msra.mxu0 0.0
      %268 = vmatpush.msra.mxu0 0.0
      %269 = vmatpush.msra.mxu0 %v252
      %270 = vmatpush.msra.mxu0 %v251
      %271 = vmatpush.msra.mxu0 %v250
      %272 = vmatpush.msra.mxu0 %v249
      %273 = vmatmul.f32.gmra.mxu0 %v255
      %v274 = vpop.f32.mrf.mxu0
      %v275 = vadd.f32 0.0, %v274
      %276 = vdwg.mxu0
      %277 = vst [vmem:[%s239] sm:$0xff] %v275
      %p278 = scmp.eq.s32.totalorder %s21, 0
      // Predicated region
      $region29: #{dadb_forward.2} parent=27 // pred_check
        %p279 = pneg %p278
      $region30: #{dadb_forward.2} parent=27 // pred_check_branch
        %281 = sbr.rel (%p279) target = $region32
      $region31: #{dadb_forward.2} parent=27 // pred_region
        %vm282 = vcmask 7168
        %283 = vst.msk [vmem:[%s243] sm:$0xff] %vm282, 0.0
        %284 = vst.msk [vmem:[%s247] sm:$0xff] %vm282, 0.0
      $region32: #{dadb_forward.2} parent=27 // pred_fallthru
        _
      %v285 = vld [vmem:[%s243] sm:$0xff]
      %286 = vadd.xlane.f32.xlu0 %v275
      %v287 = vpop.xlane.xlu0 %286
      %v288 = vadd.f32 %v285, %v287
      %vm289 = vcmask 7168
      %290 = vst.msk [vmem:[%s243] sm:$0xff] %vm289, %v288
      %v291 = vld [vmem:[%s247] sm:$0xff]
      %v292 = vmul.f32 %v275, %v275
      %293 = vadd.xlane.f32.xlu0 %v292
      %v294 = vpop.xlane.xlu0 %293
      %v295 = vadd.f32 %v291, %v294
      %296 = vst.msk [vmem:[%s247] sm:$0xff] %vm289, %v295
      %p297 = scmp.lt.s32.totalorder %s20, 1
      %s298 = scalar_select %p297, %s20, 1
      %p299 = scmp.lt.s32.totalorder %s21, 0
      %s300 = scalar_select %p299, %s21, 0
      %s301 = sadd.s32 %s300, %s298
      %s302 = smul.addr %s301, 8
      %s303 = scalar_lea.vmem %s2, %s302
      %p304 = scmp.lt.s32.totalorder %s20, 1
      %s305 = scalar_select %p304, %s20, 1
      %s306 = smul.addr %s305, 8
      %s307 = scalar_lea.vmem %s3, %s306
      %p308 = scmp.lt.s32.totalorder %s20, 1
      %s309 = scalar_select %p308, %s20, 1
      %s310 = smul.addr %s309, 8
      %s311 = scalar_lea.vmem %s4, %s310
      // Predicated region
      $region33: #{dadb_forward.2} parent=27 // pred_check
        %p312 = pneg %p97
      $region34: #{dadb_forward.2} parent=27 // pred_check_branch
        %314 = sbr.rel (%p312) target = $region36
      $region35: #{dadb_forward.2} parent=27 // pred_region
        _
      $region36: #{dadb_forward.2} parent=27 // pred_fallthru
        _
      // Predicated region
      $region37: #{dadb_forward.2} parent=27 // pred_check
        %p315 = pneg %p123
      $region38: #{dadb_forward.2} parent=27 // pred_check_branch
        %317 = sbr.rel (%p315) target = $region40
      $region39: #{dadb_forward.2} parent=27 // pred_region
        _
      $region40: #{dadb_forward.2} parent=27 // pred_fallthru
        _
      // Predicated region
      $region41: #{dadb_forward.2} parent=27 // pred_check
        %p318 = pneg %p149
      $region42: #{dadb_forward.2} parent=27 // pred_check_branch
        %320 = sbr.rel (%p318) target = $region44
      $region43: #{dadb_forward.2} parent=27 // pred_region
        _
      $region44: #{dadb_forward.2} parent=27 // pred_fallthru
        _
    $region28: #{dadb_forward.2} parent=5 // pred_fallthru
      _
    %p321 = scmp.le.s32.totalorder 2, %s11
    // Predicated region
    $region45: #{dadb_forward.2} parent=5 // pred_check
      %p322 = pneg %p321
    $region46: #{dadb_forward.2} parent=5 // pred_check_branch
      %324 = sbr.rel (%p322) target = $region48
    $region47: #{dadb_forward.2} parent=5 // pred_region
      %s325 = ssub.s32 %s11, 2
      // Predicated region
      $region49: #{dadb_forward.2} parent=47 // pred_check
        %p326 = pneg %p103
      $region50: #{dadb_forward.2} parent=47 // pred_check_branch
        %328 = sbr.rel (%p326) target = $region52
      $region51: #{dadb_forward.2} parent=47 // pred_region
        %p329 = scmp.lt.s32.totalorder %s22, 1
        %s330 = scalar_select %p329, %s22, 1
        %p331 = scmp.lt.s32.totalorder %s23, 0
        %s332 = scalar_select %p331, %s23, 0
        %s333 = sadd.s32 %s332, %s330
        %s334 = smul.addr %s333, 8
        %s335 = scalar_lea.vmem %s2, %s334
      $region52: #{dadb_forward.2} parent=47 // pred_fallthru
        _
      // Predicated region
      $region53: #{dadb_forward.2} parent=47 // pred_check
        %p336 = pneg %p129
      $region54: #{dadb_forward.2} parent=47 // pred_check_branch
        %338 = sbr.rel (%p336) target = $region56
      $region55: #{dadb_forward.2} parent=47 // pred_region
        %p339 = scmp.lt.s32.totalorder %s22, 1
        %s340 = scalar_select %p339, %s22, 1
        %s341 = smul.addr %s340, 8
        %s342 = scalar_lea.vmem %s3, %s341
      $region56: #{dadb_forward.2} parent=47 // pred_fallthru
        _
      // Predicated region
      $region57: #{dadb_forward.2} parent=47 // pred_check
        %p343 = pneg %p155
      $region58: #{dadb_forward.2} parent=47 // pred_check_branch
        %345 = sbr.rel (%p343) target = $region60
      $region59: #{dadb_forward.2} parent=47 // pred_region
        %p346 = scmp.lt.s32.totalorder %s22, 1
        %s347 = scalar_select %p346, %s22, 1
        %s348 = smul.addr %s347, 8
        %s349 = scalar_lea.vmem %s4, %s348
      $region60: #{dadb_forward.2} parent=47 // pred_fallthru
        _
    $region48: #{dadb_forward.2} parent=5 // pred_fallthru
      _
  $region6: #{dadb_forward.2} parent=0 // loop_footer
    %s15 = sadd.s32 1, %s11
  $region7: #{dadb_forward.2} parent=0 // loop_footer_branch
    %10 = sbr.rel target = $region3
  $region8: #{dadb_forward.2} parent=0 // loop_exit
    _

// kernel: dadb_forward.3
$region0: #{dadb_forward.3}
  #allocation0 [shape = 'u32[]', space=smem, size = 0x4, offset = 0x4, fixed_abs, tag = 'smem constant byte address 0x4 - core index']
  #allocation1 [shape = 'u32[72,128]{1,0:T(1,128)}', space=vmem, size = 0x9000, scoped, tag = 'internal scratch']
  #allocation2 [shape = 'f32[1]{0:T(128)S(6)}', space=smem, size = 0x200, scoped, tag = 'scoped memory for dadb_forward.3']
  %s0 = inlined_call_operand.<no memory space> [shape: f32[1], index: 0, kind: input, shape index: {}]
  %s1 = inlined_call_operand.vmem [shape: f32[2,8,1], index: 1, kind: input, shape index: {}]
  %s2 = inlined_call_operand.vmem [shape: f32[2,8,1], index: 2, kind: input, shape index: {}]
  %s3 = inlined_call_operand.vmem [shape: f32[2,8,128], index: 3, kind: input, shape index: {}]
  %s4 = inlined_call_operand.vmem [shape: f32[2,8,128], index: 4, kind: output, shape index: {}]
  %s5 = sld [smem:[#allocation0]]
  $region49: #{dadb_forward.3} parent=0
    _
  %s7 = ssub.s32 1, %s5
  %s8 = scalar_select 0, %s7, %s5
  %9 = sst [smem:[#allocation2]] %s0
  loop: start=0, step=1, limit=4
  $region2: #{dadb_forward.3} parent=0 // loop_pre_header
    _
  $region3: #{dadb_forward.3} parent=0 // loop_header
    %s11 = sphi 0, %s15
    %p12 = scmp.ge.s32.totalorder %s11, 4
    %s18 = sphi 0, %s30
    %s19 = sphi 0, %s26
    %s20 = sphi 0, %s18
    %s21 = sphi 0, %s19
    %s22 = sphi 0, %s20
    %s23 = sphi 0, %s21
    %s31 = sphi 0, %s31
    %s33 = sphi 0, %s31
    %s34 = sphi 0, %s33
    %s48 = sphi 0, %s34
    %s54 = sphi 0, %s56
    %s57 = sphi 0, %s54
    %s58 = sphi 0, %s57
    %s74 = sphi 0, %s58
    %s80 = sphi 0, %s82
    %s83 = sphi 0, %s80
    %s84 = sphi 0, %s83
    %s100 = sphi 0, %s84
    %s108 = sphi 0, %s110
    %s111 = sphi 0, %s108
    %s112 = sphi 0, %s111
    %s128 = sphi 0, %s112
    %s136 = sphi 0, %s138
    %s139 = sphi 0, %s136
    %s140 = sphi 0, %s139
    %s156 = sphi 0, %s140
  $region4: #{dadb_forward.3} parent=0 // loop_header_branch
    %14 = sbr.rel (%p12) target = $region8
  $region5: #{dadb_forward.3} parent=0 // loop_body
    %s16 = ssub.s32 %s11, 1
    %s17 = ssub.s32 %s11, 2
    %s24 = sadd.s32 1, %s19
    %p25 = scmp.ge.s32.totalorder %s24, 1
    %s26 = scalar_select %p25, 0, %s24
    %s27 = sadd.s32 1, %s18
    %s28 = scalar_select %p25, %s27, %s18
    %p29 = scmp.ge.s32.totalorder %s28, 2
    %s30 = scalar_select %p29, 0, %s28
    %s32 = sadd.s32 %s31, 1
    %p35 = scmp.eq.s32.totalorder %s11, 1
    %p36 = scmp.ne.s32.totalorder %s31, %s33
    %p37 = scmp.eq.s32.totalorder %s11, 0
    %p38 = por %p36, %p37
    %p39 = scmp.ne.s32.totalorder %s31, %s33
    %p40 = scmp.eq.s32.totalorder %s16, 1
    %p41 = por %p39, %p40
    %p42 = scmp.ne.s32.totalorder %s33, %s34
    %p43 = scmp.eq.s32.totalorder %s16, 0
    %p44 = por %p42, %p43
    %p45 = scmp.ne.s32.totalorder %s33, %s34
    %p46 = scmp.eq.s32.totalorder %s17, 1
    %p47 = por %p45, %p46
    %p49 = scmp.ne.s32.totalorder %s34, %s48
    %p50 = scmp.eq.s32.totalorder %s17, 0
    %p51 = por %p49, %p50
    %s52 = ssub.s32 %s18, %s30
    %p53 = scmp.eq.s32.totalorder %s52, 0
    %s55 = sadd.s32 %s54, 1
    %s56 = scalar_select %p53, %s54, %s55
    %p59 = pneg %p53
    %p60 = scmp.eq.s32.totalorder %s11, 1
    %p61 = por %p59, %p60
    %p62 = scmp.ne.s32.totalorder %s54, %s57
    %p63 = scmp.eq.s32.totalorder %s11, 0
    %p64 = por %p62, %p63
    %p65 = scmp.ne.s32.totalorder %s54, %s57
    %p66 = scmp.eq.s32.totalorder %s16, 1
    %p67 = por %p65, %p66
    %p68 = scmp.ne.s32.totalorder %s57, %s58
    %p69 = scmp.eq.s32.totalorder %s16, 0
    %p70 = por %p68, %p69
    %p71 = scmp.ne.s32.totalorder %s57, %s58
    %p72 = scmp.eq.s32.totalorder %s17, 1
    %p73 = por %p71, %p72
    %p75 = scmp.ne.s32.totalorder %s58, %s74
    %p76 = scmp.eq.s32.totalorder %s17, 0
    %p77 = por %p75, %p76
    %s78 = ssub.s32 %s18, %s30
    %p79 = scmp.eq.s32.totalorder %s78, 0
    %s81 = sadd.s32 %s80, 1
    %s82 = scalar_select %p79, %s80, %s81
    %p85 = pneg %p79
    %p86 = scmp.eq.s32.totalorder %s11, 1
    %p87 = por %p85, %p86
    %p88 = scmp.ne.s32.totalorder %s80, %s83
    %p89 = scmp.eq.s32.totalorder %s11, 0
    %p90 = por %p88, %p89
    %p91 = scmp.ne.s32.totalorder %s80, %s83
    %p92 = scmp.eq.s32.totalorder %s16, 1
    %p93 = por %p91, %p92
    %p94 = scmp.ne.s32.totalorder %s83, %s84
    %p95 = scmp.eq.s32.totalorder %s16, 0
    %p96 = por %p94, %p95
    %p97 = scmp.ne.s32.totalorder %s83, %s84
    %p98 = scmp.eq.s32.totalorder %s17, 1
    %p99 = por %p97, %p98
    %p101 = scmp.ne.s32.totalorder %s84, %s100
    %p102 = scmp.eq.s32.totalorder %s17, 0
    %p103 = por %p101, %p102
    %s104 = ssub.s32 %s18, %s30
    %s105 = ssub.s32 %s19, %s26
    %s106 = sor.u32 %s104, %s105
    %p107 = scmp.eq.s32.totalorder %s106, 0
    %s109 = sadd.s32 %s108, 1
    %s110 = scalar_select %p107, %s108, %s109
    %p113 = pneg %p107
    %p114 = scmp.eq.s32.totalorder %s11, 1
    %p115 = por %p113, %p114
    %p116 = scmp.ne.s32.totalorder %s108, %s111
    %p117 = scmp.eq.s32.totalorder %s11, 0
    %p118 = por %p116, %p117
    %p119 = scmp.ne.s32.totalorder %s108, %s111
    %p120 = scmp.eq.s32.totalorder %s16, 1
    %p121 = por %p119, %p120
    %p122 = scmp.ne.s32.totalorder %s111, %s112
    %p123 = scmp.eq.s32.totalorder %s16, 0
    %p124 = por %p122, %p123
    %p125 = scmp.ne.s32.totalorder %s111, %s112
    %p126 = scmp.eq.s32.totalorder %s17, 1
    %p127 = por %p125, %p126
    %p129 = scmp.ne.s32.totalorder %s112, %s128
    %p130 = scmp.eq.s32.totalorder %s17, 0
    %p131 = por %p129, %p130
    %s132 = ssub.s32 %s18, %s30
    %s133 = ssub.s32 %s19, %s26
    %s134 = sor.u32 %s132, %s133
    %p135 = scmp.eq.s32.totalorder %s134, 0
    %s137 = sadd.s32 %s136, 1
    %s138 = scalar_select %p135, %s136, %s137
    %p141 = pneg %p135
    %p142 = scmp.eq.s32.totalorder %s11, 1
    %p143 = por %p141, %p142
    %p144 = scmp.ne.s32.totalorder %s136, %s139
    %p145 = scmp.eq.s32.totalorder %s11, 0
    %p146 = por %p144, %p145
    %p147 = scmp.ne.s32.totalorder %s136, %s139
    %p148 = scmp.eq.s32.totalorder %s16, 1
    %p149 = por %p147, %p148
    %p150 = scmp.ne.s32.totalorder %s139, %s140
    %p151 = scmp.eq.s32.totalorder %s16, 0
    %p152 = por %p150, %p151
    %p153 = scmp.ne.s32.totalorder %s139, %s140
    %p154 = scmp.eq.s32.totalorder %s17, 1
    %p155 = por %p153, %p154
    %p157 = scmp.ne.s32.totalorder %s140, %s156
    %p158 = scmp.eq.s32.totalorder %s17, 0
    %p159 = por %p157, %p158
    %p160 = scmp.le.s32.totalorder 1, %s11
    %p161 = scmp.lt.s32.totalorder %s11, 3
    %p162 = pnand %p160, %p161
    %p163 = pneg %p162
    // Predicated region
    $region9: #{dadb_forward.3} parent=5 // pred_check
      _
    $region10: #{dadb_forward.3} parent=5 // pred_check_branch
      %165 = sbr.rel (%p162) target = $region12
    $region11: #{dadb_forward.3} parent=5 // pred_region
      %s166 = ssub.s32 %s11, 1
      // Predicated region
      $region13: #{dadb_forward.3} parent=11 // pred_check
        %p167 = pneg %p44
      $region14: #{dadb_forward.3} parent=11 // pred_check_branch
        %169 = sbr.rel (%p167) target = $region16
      $region15: #{dadb_forward.3} parent=11 // pred_region
        _
      $region16: #{dadb_forward.3} parent=11 // pred_fallthru
        _
    $region12: #{dadb_forward.3} parent=5 // pred_fallthru
      _
    %p170 = scmp.lt.s32.totalorder %s11, 2
    // Predicated region
    $region17: #{dadb_forward.3} parent=5 // pred_check
      %p171 = pneg %p170
    $region18: #{dadb_forward.3} parent=5 // pred_check_branch
      %173 = sbr.rel (%p171) target = $region20
    $region19: #{dadb_forward.3} parent=5 // pred_region
      // Predicated region
      $region21: #{dadb_forward.3} parent=19 // pred_check
        %p174 = pneg %p64
      $region22: #{dadb_forward.3} parent=19 // pred_check_branch
        %176 = sbr.rel (%p174) target = $region24
      $region23: #{dadb_forward.3} parent=19 // pred_region
        %p177 = scmp.lt.s32.totalorder %s18, 1
        %s178 = scalar_select %p177, %s18, 1
        %s179 = smul.addr %s178, 8
        %s180 = scalar_lea.vmem %s1, %s179
      $region24: #{dadb_forward.3} parent=19 // pred_fallthru
        _
      // Predicated region
      $region25: #{dadb_forward.3} parent=19 // pred_check
        %p181 = pneg %p90
      $region26: #{dadb_forward.3} parent=19 // pred_check_branch
        %183 = sbr.rel (%p181) target = $region28
      $region27: #{dadb_forward.3} parent=19 // pred_region
        %p184 = scmp.lt.s32.totalorder %s18, 1
        %s185 = scalar_select %p184, %s18, 1
        %s186 = smul.addr %s185, 8
        %s187 = scalar_lea.vmem %s2, %s186
      $region28: #{dadb_forward.3} parent=19 // pred_fallthru
        _
      // Predicated region
      $region29: #{dadb_forward.3} parent=19 // pred_check
        %p188 = pneg %p118
      $region30: #{dadb_forward.3} parent=19 // pred_check_branch
        %190 = sbr.rel (%p188) target = $region32
      $region31: #{dadb_forward.3} parent=19 // pred_region
        %p191 = scmp.lt.s32.totalorder %s18, 1
        %s192 = scalar_select %p191, %s18, 1
        %p193 = scmp.lt.s32.totalorder %s19, 0
        %s194 = scalar_select %p193, %s19, 0
        %s195 = sadd.s32 %s194, %s192
        %s196 = smul.addr %s195, 8
        %s197 = scalar_lea.vmem %s3, %s196
      $region32: #{dadb_forward.3} parent=19 // pred_fallthru
        _
    $region20: #{dadb_forward.3} parent=5 // pred_fallthru
      _
    %p198 = scmp.le.s32.totalorder 1, %s11
    %p199 = scmp.lt.s32.totalorder %s11, 3
    %p200 = pnand %p198, %p199
    %p201 = pneg %p200
    // Predicated region
    $region33: #{dadb_forward.3} parent=5 // pred_check
      _
    $region34: #{dadb_forward.3} parent=5 // pred_check_branch
      %203 = sbr.rel (%p200) target = $region36
    $region35: #{dadb_forward.3} parent=5 // pred_region
      %s204 = ssub.s32 %s11, 1
      %p205 = pneg %p44
      %p206 = pneg %p41
      %p207 = scmp.lt.s32.totalorder %s20, 1
      %s208 = scalar_select %p207, %s20, 1
      %s209 = smul.addr %s208, 8
      %s210 = scalar_lea.vmem %s1, %s209
      %p211 = pneg %p70
      %p212 = pneg %p67
      %p213 = scmp.lt.s32.totalorder %s20, 1
      %s214 = scalar_select %p213, %s20, 1
      %s215 = smul.addr %s214, 8
      %s216 = scalar_lea.vmem %s2, %s215
      %p217 = pneg %p96
      %p218 = pneg %p93
      %p219 = scmp.lt.s32.totalorder %s20, 1
      %s220 = scalar_select %p219, %s20, 1
      %p221 = scmp.lt.s32.totalorder %s21, 0
      %s222 = scalar_select %p221, %s21, 0
      %s223 = sadd.s32 %s222, %s220
      %s224 = smul.addr %s223, 8
      %s225 = scalar_lea.vmem %s3, %s224
      %p226 = pneg %p124
      %p227 = pneg %p121
      %p228 = pneg %p152
      %p229 = pneg %p149
      %p230 = scmp.lt.s32.totalorder %s20, 1
      %s231 = scalar_select %p230, %s20, 1
      %p232 = scmp.lt.s32.totalorder %s21, 0
      %s233 = scalar_select %p232, %s21, 0
      %s234 = sadd.s32 %s233, %s231
      %s235 = smul.addr %s234, 8
      %s236 = scalar_lea.vmem %s4, %s235
      %p237 = scmp.lt.s32.totalorder %s20, 1
      %s238 = scalar_select %p237, %s20, 1
      %s239 = smul.addr %s238, 8
      %s240 = scalar_lea.vmem %s1, %s239
      %p241 = scmp.lt.s32.totalorder %s20, 1
      %s242 = scalar_select %p241, %s20, 1
      %s243 = smul.addr %s242, 8
      %s244 = scalar_lea.vmem %s2, %s243
      %p245 = scmp.lt.s32.totalorder %s20, 1
      %s246 = scalar_select %p245, %s20, 1
      %p247 = scmp.lt.s32.totalorder %s21, 0
      %s248 = scalar_select %p247, %s21, 0
      %s249 = sadd.s32 %s248, %s246
      %s250 = smul.addr %s249, 8
      %s251 = scalar_lea.vmem %s3, %s250
      %p252 = scmp.lt.s32.totalorder %s20, 1
      %s253 = scalar_select %p252, %s20, 1
      %p254 = scmp.lt.s32.totalorder %s21, 0
      %s255 = scalar_select %p254, %s21, 0
      %s256 = sadd.s32 %s255, %s253
      %s257 = smul.addr %s256, 8
      %s258 = scalar_lea.vmem %s4, %s257
      %s259 = sld [smem:[#allocation2]]
      %v260 = vld [vmem:[%s251] sm:$0xff]
      %v261 = vld [vmem:[%s240] sm:$0xff]
      %263 = vset.pattern.permute.xlu0 0
      %264 = vperm.xlu0 %263, %v261
      %v265 = vpop.permute.xlu0 %264
      %v267 = vsub.f32 %v260, %v265
      %v268 = vld [vmem:[%s244] sm:$0xff]
      %270 = vset.pattern.permute.xlu0 0
      %271 = vperm.xlu0 %270, %v268
      %v272 = vpop.permute.xlu0 %271
      %v274 = vmul.f32 %v267, %v272
      %vm275 = vcmp.ge.f32.partialorder %v274, 0.0
      %v276 = vstv %s259
      %v277 = vmul.f32 %v276, %v274
      %v278 = vsel %vm275, %v274, %v277
      %279 = vst [vmem:[%s258] sm:$0xff] %v278
      %p280 = scmp.lt.s32.totalorder %s20, 1
      %s281 = scalar_select %p280, %s20, 1
      %p282 = scmp.lt.s32.totalorder %s21, 0
      %s283 = scalar_select %p282, %s21, 0
      %s284 = sadd.s32 %s283, %s281
      %s285 = smul.addr %s284, 8
      %s286 = scalar_lea.vmem %s4, %s285
      // Predicated region
      $region37: #{dadb_forward.3} parent=35 // pred_check
        %p287 = pneg %p149
      $region38: #{dadb_forward.3} parent=35 // pred_check_branch
        %289 = sbr.rel (%p287) target = $region40
      $region39: #{dadb_forward.3} parent=35 // pred_region
        _
      $region40: #{dadb_forward.3} parent=35 // pred_fallthru
        _
    $region36: #{dadb_forward.3} parent=5 // pred_fallthru
      _
    %p290 = scmp.le.s32.totalorder 2, %s11
    // Predicated region
    $region41: #{dadb_forward.3} parent=5 // pred_check
      %p291 = pneg %p290
    $region42: #{dadb_forward.3} parent=5 // pred_check_branch
      %293 = sbr.rel (%p291) target = $region44
    $region43: #{dadb_forward.3} parent=5 // pred_region
      %s294 = ssub.s32 %s11, 2
      // Predicated region
      $region45: #{dadb_forward.3} parent=43 // pred_check
        %p295 = pneg %p155
      $region46: #{dadb_forward.3} parent=43 // pred_check_branch
        %297 = sbr.rel (%p295) target = $region48
      $region47: #{dadb_forward.3} parent=43 // pred_region
        %p298 = scmp.lt.s32.totalorder %s22, 1
        %s299 = scalar_select %p298, %s22, 1
        %p300 = scmp.lt.s32.totalorder %s23, 0
        %s301 = scalar_select %p300, %s23, 0
        %s302 = sadd.s32 %s301, %s299
        %s303 = smul.addr %s302, 8
        %s304 = scalar_lea.vmem %s4, %s303
      $region48: #{dadb_forward.3} parent=43 // pred_fallthru
        _
    $region44: #{dadb_forward.3} parent=5 // pred_fallthru
      _
  $region6: #{dadb_forward.3} parent=0 // loop_footer
    %s15 = sadd.s32 1, %s11
  $region7: #{dadb_forward.3} parent=0 // loop_footer_branch
    %10 = sbr.rel target = $region3
  $region8: #{dadb_forward.3} parent=0 // loop_exit
    _

</llo_original>
